<compile_context>
chip_gen: v7x
topology: tpu7x:2x2x1
jax: 0.10.0
libtpu: 0.0.40
codegen_flags: <defaults>
</compile_context>

<pallas_src>
import functools

import jax
import jax.numpy as jnp
from jax.experimental import pallas as pl
from jax.experimental.pallas import tpu as pltpu


def _gl2_kernel(d2_ref, u_ref, psi_ref, out_ref, acc_ref, *, inv_eps2, bt):
    """One (batch-tile, W-tile) block per grid step.

    d2_ref : (H, H)          VMEM  second-difference operator along dim 0 (G @ G)
    u_ref  : (bt, 2, H, wt)  VMEM  natural-layout tile of u
    psi_ref: (bt, 2, H, wt)  VMEM  natural-layout tile of psi
    out_ref: (1, 1)          SMEM  un-normalized partial sum for this block
    acc_ref: (H, wt)         VMEM  scratch elementwise accumulator
    """
    d2 = d2_ref[...]
    acc_ref[...] = jnp.zeros_like(acc_ref)

    @pl.loop(0, bt)
    def _(b):
        u_b = u_ref[b]        # (2, H, wt)
        psi_b = psi_ref[b]    # (2, H, wt)
        # dim-0 second derivative of (u_x + u_y): exactly the PyTorch tuple-[0]
        # "laplacian" (only d^2/dx^2 terms), fused via linearity of D2.
        lap = jnp.dot(d2, u_b[0] + u_b[1], preferred_element_type=jnp.float32)
        pr = psi_b[0]
        pi = psi_b[1]
        # No sqrt round-trip: use the squared magnitude directly.
        factor = inv_eps2 * (1.0 - (pr * pr + pi * pi))
        gr = lap + factor * pr
        gi = factor * pi
        acc_ref[...] += gr * gr + gi * gi

    out_ref[0, 0] = jnp.sum(acc_ref[...])


def _gradient_op_dim0(H, dtype=jnp.float32):
    """Matrix G with G @ f == torch.gradient(f, dim=0)[0] (spacing=1, edge_order=1)."""
    idx = jnp.arange(1, H - 1)
    G = jnp.zeros((H, H), dtype)
    G = G.at[idx, idx - 1].set(-0.5)
    G = G.at[idx, idx + 1].set(0.5)
    G = G.at[0, 0].set(-1.0)
    G = G.at[0, 1].set(1.0)
    G = G.at[H - 1, H - 2].set(-1.0)
    G = G.at[H - 1, H - 1].set(1.0)
    return G


def _vmem_capacity_bytes():
    """Physical VMEM of the current chip; conservative (v7x per-TC) fallback."""
    try:
        info = pltpu.get_tpu_info()
        cap = getattr(info, "vmem_capacity_bytes", None)
        if cap:
            return int(cap)
    except Exception:
        pass
    return 64 * 1024 * 1024


def _choose_tiles(B, C, H, W, tile_budget_bytes, *, min_parallel_tile_bytes=2 << 20):
    """Pick (bt, wt): batch-tile and lane(W)-tile sizes.

    * bt divides B; wt divides W and is either W or a multiple of 128, so the
      (bt, C, H, wt) block always satisfies the (8, 128) rule (H full, wt full
      or 128-multiple).
    * Double-buffered u+psi tiles must fit the budget.
    * Prefer the fewest/largest steps; but if one step would hold the whole
      batch and splitting keeps tiles >= min_parallel_tile_bytes, use >= 2
      steps so a 2-TensorCore chip (v7x) can shard the "parallel" grid
      (an extra ~0.35 us step is negligible on single-TC v5e/v6e).
    """
    def tile_bytes(bt, wt):
        return 2 * bt * C * H * wt * 4          # u + psi, one buffer each

    def fits(bt, wt):
        return 2 * tile_bytes(bt, wt) <= tile_budget_bytes   # double-buffered

    b_divs = [d for d in range(B, 0, -1) if B % d == 0]      # descending
    bt = next((d for d in b_divs if fits(d, W)), None)
    if bt is not None:
        if bt == B and B >= 2:
            for d in b_divs[1:]:
                if fits(d, W) and tile_bytes(d, W) >= min_parallel_tile_bytes:
                    return d, W
        return bt, W

    # Even a single sample is too big: split the lane (W) axis into
    # 128-multiples that divide W (keeps blocks legal and DMAs contiguous).
    w_divs = [w for w in range(W - W % 128, 127, -128) if W % w == 0]
    for wt in w_divs:
        if fits(1, wt):
            return 1, wt
    # Last resort: smallest legal tile; the wrapper raises vmem_limit_bytes.
    return 1, (w_divs[-1] if w_divs else W)


def gl2_loss(u, psi, epsilon=1.0, *, max_batch_tile=None):
    assert u.ndim == 4 and u.shape[1] == 2 and psi.shape == u.shape
    B, C, H, W = u.shape
    u = u.astype(jnp.float32)
    psi = psi.astype(jnp.float32)

    # Composed second-derivative operator along dim 0 (boundary rows included).
    G = _gradient_op_dim0(H)
    d2 = (G @ G).astype(jnp.float32)

    # Generation-aware VMEM plan (v5e/v6e: 128 MiB, v7x: 64 MiB per TC).
    vmem_cap = _vmem_capacity_bytes()
    vmem_limit = min((vmem_cap * 3) // 4, 96 * 1024 * 1024)
    d2_bytes = 2 * H * H * 4                 # D2 is double-buffered by the pipeline
    acc_bytes = H * W * 4                    # accumulator scratch (worst case wt=W)
    slack = 2 * 1024 * 1024
    tile_budget = max(vmem_limit - d2_bytes - acc_bytes - slack, 1 << 20)

    bt, wt = _choose_tiles(B, C, H, W, tile_budget)
    if max_batch_tile is not None:           # testing/tuning hook
        bt = max(1, min(bt, int(max_batch_tile)))
        while B % bt:
            bt -= 1
    nb, nw = B // bt, W // wt

    # Keep the scoped VMEM limit consistent with what the chosen tiling needs.
    needed = 4 * bt * C * H * wt * 4 + d2_bytes + H * wt * 4 + slack
    vmem_limit = min(max(vmem_limit, needed), vmem_cap)

    kernel = functools.partial(_gl2_kernel, inv_eps2=float(1.0 / epsilon ** 2), bt=bt)

    partials = pl.pallas_call(
        kernel,
        out_shape=jax.ShapeDtypeStruct((nb, nw), jnp.float32),
        grid_spec=pltpu.PrefetchScalarGridSpec(
            num_scalar_prefetch=0,
            grid=(nb, nw),
            in_specs=[
                pl.BlockSpec((H, H), lambda i, j: (0, 0)),                # D2 (tiny, resident)
                pl.BlockSpec((bt, C, H, wt), lambda i, j: (i, 0, 0, j)),  # u tile, natural layout
                pl.BlockSpec((bt, C, H, wt), lambda i, j: (i, 0, 0, j)),  # psi tile, natural layout
            ],
            out_specs=pl.BlockSpec((1, 1), lambda i, j: (i, j),
                                   memory_space=pltpu.SMEM),              # scalar partial per step
            scratch_shapes=[pltpu.VMEM((H, wt), jnp.float32)],
        ),
        compiler_params=pltpu.CompilerParams(
            dimension_semantics=("parallel", "parallel"),
            vmem_limit_bytes=int(vmem_limit),
        ),
    )(d2, u, psi)

    # Per-sample mean then mean over batch == global sum / (B*H*W) since every
    # sample has the same H*W element count.
    return jnp.sum(partials) / jnp.float32(B * H * W)


def _reference_loss(u, psi, epsilon=1.0):
    """Pure-JAX reference with identical (tuple-[0]) semantics, for verification."""
    B = u.shape[0]
    total = 0.0
    for i in range(B):
        u_x, u_y = u[i, 0], u[i, 1]
        pr, pim = psi[i, 0], psi[i, 1]
        g0 = lambda f: jnp.gradient(f, axis=0)
        lap = g0(g0(u_x)) + g0(g0(u_y))
        mag = jnp.sqrt(pr ** 2 + pim ** 2)
        fac = (1.0 / epsilon ** 2) * (1.0 - mag ** 2)
        gr = lap + fac * pr
        gi = fac * pim
        total = total + jnp.mean(gr ** 2 + gi ** 2)
    return total / B


if __name__ == "__main__":
    key = jax.random.PRNGKey(0)
    ku, kp = jax.random.split(key)
    B, C, H, W = 2, 2, 16, 16
    u = jax.random.normal(ku, (B, C, H, W), dtype=jnp.float32)
    psi = jax.random.normal(kp, (B, C, H, W), dtype=jnp.float32)

    # Single-tile path (whole batch in one grid step).
    loss = jax.block_until_ready(gl2_loss(u, psi, epsilon=1.0))
    ref = _reference_loss(u, psi, epsilon=1.0)
    assert jnp.allclose(loss, ref, rtol=1e-5, atol=1e-5), (loss, ref)

    # Multi-tile path (2 parallel grid steps, per-step SMEM partials).
    loss2 = jax.block_until_ready(gl2_loss(u, psi, epsilon=0.7, max_batch_tile=1))
    ref2 = _reference_loss(u, psi, epsilon=0.7)
    assert jnp.allclose(loss2, ref2, rtol=1e-5, atol=1e-5), (loss2, ref2)

    print("KERNEL_OK")
</pallas_src>

<mosaic_0001>
module attributes {stable_mosaic.version = 11 : i64} {
  func.func @_gl2_kernel(%arg0: i32, %arg1: i32, %arg2: memref<16x16xf32, #tpu.memory_space<vmem>>, %arg3: memref<2x2x16x16xf32, #tpu.memory_space<vmem>>, %arg4: memref<2x2x16x16xf32, #tpu.memory_space<vmem>>, %arg5: memref<1x1xf32, #tpu.memory_space<smem>>, %arg6: memref<16x16xf32, #tpu.memory_space<vmem>>) attributes {dimension_semantics = [#tpu.dimension_semantics<parallel>, #tpu.dimension_semantics<parallel>], iteration_bounds = array<i64: 1, 1>, scalar_prefetch = 0 : i64, scratch_operands = 1 : i64, tpu.core_type = #tpu.core_type<tc>, window_params = [{pipeline_mode = #tpu.pipeline_mode<synchronous>, transform_indices = @transform_0, window_bounds = array<i64: 16, 16>}, {transform_indices = @transform_1, window_bounds = array<i64: 2, 2, 16, 16>}, {transform_indices = @transform_2, window_bounds = array<i64: 2, 2, 16, 16>}, {transform_indices = @transform_3, window_bounds = array<i64: 1, 1>}]} {
    %c0 = arith.constant 0 : index
    %c0_0 = arith.constant 0 : index
    %0 = vector.load %arg2[%c0, %c0_0] : memref<16x16xf32, #tpu.memory_space<vmem>>, vector<16x16xf32>
    %cst = arith.constant 0.000000e+00 : f32
    %1 = vector.broadcast %cst : f32 to vector<16x16xf32>
    %c0_1 = arith.constant 0 : index
    %c0_2 = arith.constant 0 : index
    %2 = vector.load %arg6[%c0_1, %c0_2] : memref<16x16xf32, #tpu.memory_space<vmem>>, vector<16x16xf32>
    tpu.vector_store %arg6[%c0_1, %c0_2], %1 {strides = array<i32>} : memref<16x16xf32, #tpu.memory_space<vmem>>, vector<16x16xf32>,
    %c0_i32 = arith.constant 0 : i32
    %c2_i32 = arith.constant 2 : i32
    %3 = arith.addi %c0_i32, %c2_i32 : i32
    %c1_i32 = arith.constant 1 : i32
    scf.for %arg7 = %c0_i32 to %3 step %c1_i32  : i32 {
      %c1_i32_9 = arith.constant 1 : i32
      %10 = arith.muli %arg7, %c1_i32_9 : i32
      %c0_i32_10 = arith.constant 0 : i32
      %11 = arith.addi %c0_i32_10, %10 : i32
      %12 = arith.index_cast %11 : i32 to index
      %c0_11 = arith.constant 0 : index
      %c0_12 = arith.constant 0 : index
      %c0_13 = arith.constant 0 : index
      %13 = vector.load %arg3[%12, %c0_11, %c0_12, %c0_13] : memref<2x2x16x16xf32, #tpu.memory_space<vmem>>, vector<1x2x16x16xf32>
      %14 = vector.shape_cast %13 : vector<1x2x16x16xf32> to vector<2x16x16xf32>
      %15 = arith.index_cast %11 : i32 to index
      %c0_14 = arith.constant 0 : index
      %c0_15 = arith.constant 0 : index
      %c0_16 = arith.constant 0 : index
      %16 = vector.load %arg4[%15, %c0_14, %c0_15, %c0_16] : memref<2x2x16x16xf32, #tpu.memory_space<vmem>>, vector<1x2x16x16xf32>
      %17 = vector.shape_cast %16 : vector<1x2x16x16xf32> to vector<2x16x16xf32>
      %18 = vector.extract_strided_slice %14 {offsets = [0, 0, 0], sizes = [1, 16, 16], strides = [1, 1, 1]} : vector<2x16x16xf32> to vector<1x16x16xf32>
      %19 = vector.shape_cast %18 : vector<1x16x16xf32> to vector<16x16xf32>
      %20 = vector.extract_strided_slice %14 {offsets = [1, 0, 0], sizes = [1, 16, 16], strides = [1, 1, 1]} : vector<2x16x16xf32> to vector<1x16x16xf32>
      %21 = vector.shape_cast %20 : vector<1x16x16xf32> to vector<16x16xf32>
      %22 = arith.addf %19, %21 : vector<16x16xf32>
      %cst_17 = arith.constant dense<0.000000e+00> : vector<16x16xf32>
      %23 = tpu.matmul %0, %22, %cst_17 {dimension_numbers = #tpu.dot_dimension_numbers<[1], [0], [0], [1], [0, 0, 1, 1], [], []>} : vector<16x16xf32>, vector<16x16xf32>, vector<16x16xf32> -> vector<16x16xf32>
      %24 = vector.extract_strided_slice %17 {offsets = [0, 0, 0], sizes = [1, 16, 16], strides = [1, 1, 1]} : vector<2x16x16xf32> to vector<1x16x16xf32>
      %25 = vector.shape_cast %24 : vector<1x16x16xf32> to vector<16x16xf32>
      %26 = vector.extract_strided_slice %17 {offsets = [1, 0, 0], sizes = [1, 16, 16], strides = [1, 1, 1]} : vector<2x16x16xf32> to vector<1x16x16xf32>
      %27 = vector.shape_cast %26 : vector<1x16x16xf32> to vector<16x16xf32>
      %28 = arith.mulf %25, %25 : vector<16x16xf32>
      %29 = arith.mulf %27, %27 : vector<16x16xf32>
      %30 = arith.addf %28, %29 : vector<16x16xf32>
      %cst_18 = arith.constant 1.000000e+00 : f32
      %31 = vector.broadcast %cst_18 : f32 to vector<16x16xf32>
      %32 = arith.subf %31, %30 : vector<16x16xf32>
      %cst_19 = arith.constant 1.000000e+00 : f32
      %33 = vector.broadcast %cst_19 : f32 to vector<16x16xf32>
      %34 = arith.mulf %33, %32 : vector<16x16xf32>
      %35 = arith.mulf %34, %25 : vector<16x16xf32>
      %36 = arith.addf %23, %35 : vector<16x16xf32>
      %37 = arith.mulf %34, %27 : vector<16x16xf32>
      %c0_20 = arith.constant 0 : index
      %c0_21 = arith.constant 0 : index
      %38 = vector.load %arg6[%c0_20, %c0_21] : memref<16x16xf32, #tpu.memory_space<vmem>>, vector<16x16xf32>
      %39 = arith.mulf %36, %36 : vector<16x16xf32>
      %40 = arith.mulf %37, %37 : vector<16x16xf32>
      %41 = arith.addf %39, %40 : vector<16x16xf32>
      %42 = arith.addf %38, %41 : vector<16x16xf32>
      %c0_22 = arith.constant 0 : index
      %c0_23 = arith.constant 0 : index
      %43 = vector.load %arg6[%c0_22, %c0_23] : memref<16x16xf32, #tpu.memory_space<vmem>>, vector<16x16xf32>
      tpu.vector_store %arg6[%c0_22, %c0_23], %42 {strides = array<i32>} : memref<16x16xf32, #tpu.memory_space<vmem>>, vector<16x16xf32>,
    }
    %c2_i32_3 = arith.constant 2 : i32
    %c0_4 = arith.constant 0 : index
    %c0_5 = arith.constant 0 : index
    %4 = vector.load %arg6[%c0_4, %c0_5] : memref<16x16xf32, #tpu.memory_space<vmem>>, vector<16x16xf32>
    %5 = vector.shape_cast %4 : vector<16x16xf32> to vector<1x16x16xf32>
    %cst_6 = arith.constant dense<0.000000e+00> : vector<1xf32>
    %6 = vector.multi_reduction <add>, %5, %cst_6 [1, 2] : vector<1x16x16xf32> to vector<1xf32>
    %7 = vector.shape_cast %6 : vector<1xf32> to vector<1x1x1xf32>
    %8 = vector.extract %7[0, 0, 0] : f32 from vector<1x1x1xf32>
    %c0_7 = arith.constant 0 : index
    %c0_8 = arith.constant 0 : index
    %9 = memref.load %arg5[%c0_7, %c0_8] : memref<1x1xf32, #tpu.memory_space<smem>>
    memref.store %8, %arg5[%c0_7, %c0_8] : memref<1x1xf32, #tpu.memory_space<smem>>
    return
  }
  func.func @transform_0(%arg0: i32, %arg1: i32) -> (i32, i32) {
    %c0_i32 = arith.constant 0 : i32
    %c0_i32_0 = arith.constant 0 : i32
    %c0_i32_1 = arith.constant 0 : i32
    return %c0_i32, %c0_i32_0 : i32, i32
  }
  func.func @transform_1(%arg0: i32, %arg1: i32) -> (i32, i32, i32, i32) {
    %c0_i32 = arith.constant 0 : i32
    %c0_i32_0 = arith.constant 0 : i32
    %c0_i32_1 = arith.constant 0 : i32
    return %arg0, %c0_i32, %c0_i32_0, %arg1 : i32, i32, i32, i32
  }
  func.func @transform_2(%arg0: i32, %arg1: i32) -> (i32, i32, i32, i32) {
    %c0_i32 = arith.constant 0 : i32
    %c0_i32_0 = arith.constant 0 : i32
    %c0_i32_1 = arith.constant 0 : i32
    return %arg0, %c0_i32, %c0_i32_0, %arg1 : i32, i32, i32, i32
  }
  func.func @transform_3(%arg0: i32, %arg1: i32) -> (i32, i32) {
    %c0_i32 = arith.constant 0 : i32
    return %arg0, %arg1 : i32, i32
  }
}

</mosaic_0001>

<llo_original>
// kernel: tpu_custom_call.1
$region0: #{tpu_custom_call.1}
  #allocation0 [shape = 'u32[]', space=smem, size = 0x4, offset = 0x4, fixed_abs, tag = 'smem constant byte address 0x4 - core index']
  #allocation1 [shape = 'u32[144,128]{1,0:T(1,128)}', space=vmem, size = 0x12000, scoped, tag = 'internal scratch']
  #allocation2 [shape = 'f32[16,16]{1,0:T(8,128)}', space=vmem, size = 0x2000, scoped, tag = 'scratch operand']
  %s0 = inlined_call_operand.hbm [shape: f32[16,16], index: 0, kind: input, shape index: {}]
  %s1 = inlined_call_operand.hbm [shape: f32[2,2,16,16], index: 1, kind: input, shape index: {}]
  %s2 = inlined_call_operand.hbm [shape: f32[2,2,16,16], index: 2, kind: input, shape index: {}]
  %s3 = inlined_call_operand.hbm [shape: f32[1,1], index: 3, kind: output, shape index: {}]
  %s4 = sld [smem:[#allocation0]]
  $region41: #{tpu_custom_call.1} parent=0
    _
  %s6 = ssub.s32 1, %s4
  %s7 = scalar_select 0, %s6, %s4
  $region1: #{tpu_custom_call.1} parent=0
    #allocation3 [shape = 'u8[8192]{0}', space=vmem, size = 0x2000, scoped, tag = 'input window, operand 0, single buffered']
    #allocation4 [shape = 's32[1]{0}', space=sflag, size = 0x4, scoped, tag = 'scoped memory for tpu_custom_call.1']
    #allocation5 [shape = 's32[1]{0}', space=sflag, size = 0x4, scoped, tag = 'scoped memory for tpu_custom_call.1']
    #allocation6 [shape = 'u8[32768]{0}', space=vmem, size = 0x8000, scoped, tag = 'input window, operand 1, single buffered']
    #allocation7 [shape = 's32[1]{0}', space=sflag, size = 0x4, scoped, tag = 'scoped memory for tpu_custom_call.1']
    #allocation8 [shape = 'u8[32768]{0}', space=vmem, size = 0x8000, scoped, tag = 'input window, operand 2, single buffered']
    #allocation9 [shape = 'u8[512]{0}', space=smem, size = 0x200, scoped, tag = 'output window, operand 0, single buffered']
    %8 = vsyncpa [#allocation4], 0
    %9 = vsyncpa [#allocation7], 0
    %10 = vsyncpa [#allocation5], 0
    // Predicated region
    $region2: #{tpu_custom_call.1} parent=1 // pred_check
      _
    $region3: #{tpu_custom_call.1} parent=1 // pred_check_branch
      %12 = sbr.rel (0) target = $region5
    $region4: #{tpu_custom_call.1} parent=1 // pred_region
      %s14 = ssub.s32 256, 256
      %15 = vsyncadd [#allocation4], %s14
      %s16 = sshll.u32 [#allocation3], 4
      %s17 = int_to_ptr.vmem [resolvable:$true] %s16
      %22 = dma.hbm_to_vmem [thread:$0]  %s0, 256, %s17, [#allocation4], 128, 128, 8
    $region5: #{tpu_custom_call.1} parent=1 // pred_fallthru
      _
    // Predicated region
    $region6: #{tpu_custom_call.1} parent=1 // pred_check
      _
    $region7: #{tpu_custom_call.1} parent=1 // pred_check_branch
      %24 = sbr.rel (0) target = $region9
    $region8: #{tpu_custom_call.1} parent=1 // pred_region
      %s26 = ssub.s32 1024, 1024
      %27 = vsyncadd [#allocation7], %s26
      %s28 = sshll.u32 [#allocation6], 4
      %s29 = int_to_ptr.vmem [resolvable:$true] %s28
      %34 = dma.hbm_to_vmem [thread:$0]  %s1, 1024, %s29, [#allocation7], 128, 128, 8
    $region9: #{tpu_custom_call.1} parent=1 // pred_fallthru
      _
    // Predicated region
    $region10: #{tpu_custom_call.1} parent=1 // pred_check
      _
    $region11: #{tpu_custom_call.1} parent=1 // pred_check_branch
      %36 = sbr.rel (0) target = $region13
    $region12: #{tpu_custom_call.1} parent=1 // pred_region
      %s38 = ssub.s32 1024, 1024
      %39 = vsyncadd [#allocation7], %s38
      %s40 = sshll.u32 [#allocation8], 4
      %s41 = int_to_ptr.vmem [resolvable:$true] %s40
      %46 = dma.hbm_to_vmem [thread:$0]  %s2, 1024, %s41, [#allocation7], 128, 128, 8
    $region13: #{tpu_custom_call.1} parent=1 // pred_fallthru
      _
    // Predicated region
    $region14: #{tpu_custom_call.1} parent=1 // pred_check
      _
    $region15: #{tpu_custom_call.1} parent=1 // pred_check_branch
      %48 = sbr.rel (0) target = $region17
    $region16: #{tpu_custom_call.1} parent=1 // pred_region
      %49 = dma.done [#allocation4], 256
    $region17: #{tpu_custom_call.1} parent=1 // pred_fallthru
      _
    // Predicated region
    $region18: #{tpu_custom_call.1} parent=1 // pred_check
      _
    $region19: #{tpu_custom_call.1} parent=1 // pred_check_branch
      %51 = sbr.rel (0) target = $region21
    $region20: #{tpu_custom_call.1} parent=1 // pred_region
      %52 = dma.done [#allocation7], 1024
    $region21: #{tpu_custom_call.1} parent=1 // pred_fallthru
      _
    // Predicated region
    $region22: #{tpu_custom_call.1} parent=1 // pred_check
      _
    $region23: #{tpu_custom_call.1} parent=1 // pred_check_branch
      %54 = sbr.rel (0) target = $region25
    $region24: #{tpu_custom_call.1} parent=1 // pred_region
      %55 = dma.done [#allocation7], 1024
    $region25: #{tpu_custom_call.1} parent=1 // pred_fallthru
      _
    %v56 = vld [vmem:[#allocation3] sm:$0xff]
    %v57 = vld [vmem:[#allocation3 + $0x8] sm:$0xff]
    %vm58 = vcmask 130048
    %59 = vst.msk [vmem:[#allocation2] sm:$0xff] %vm58, 0.0
    %60 = vst.msk [vmem:[#allocation2 + $0x8] sm:$0xff] %vm58, 0.0
    loop: start=0, step=1, limit=2
    $region26: #{tpu_custom_call.1} parent=1 // loop_pre_header
      _
    $region27: #{tpu_custom_call.1} parent=1 // loop_header
      %s62 = sphi 0, %s66
      %p63 = scmp.ge.s32.totalorder %s62, 2
    $region28: #{tpu_custom_call.1} parent=1 // loop_header_branch
      %65 = sbr.rel (%p63) target = $region32
    $region29: #{tpu_custom_call.1} parent=1 // loop_body
      %s67 = smul.u32 %s62, 32
      %s68 = scalar_lea.vmem [#allocation6], %s67
      %v69 = vld [vmem:[%s68] sm:$0xff]
      %v70 = vld [vmem:[%s68 + $0x8] sm:$0xff]
      %v71 = vld [vmem:[%s68 + $0x10] sm:$0xff]
      %v72 = vld [vmem:[%s68 + $0x18] sm:$0xff]
      %s73 = scalar_lea.vmem [#allocation8], %s67
      %v74 = vld [vmem:[%s73] sm:$0xff]
      %v75 = vld [vmem:[%s73 + $0x8] sm:$0xff]
      %v76 = vld [vmem:[%s73 + $0x10] sm:$0xff]
      %v77 = vld [vmem:[%s73 + $0x18] sm:$0xff]
      %v78 = vadd.f32 %v69, %v71
      %v79 = vadd.f32 %v70, %v72
      %v80 = vmul.f32 %v74, %v74
      %v81 = vmul.f32 %v75, %v75
      %v82 = vmul.f32 %v76, %v76
      %v83 = vmul.f32 %v77, %v77
      %v84 = vadd.f32 %v80, %v82
      %v85 = vadd.f32 %v81, %v83
      %v86 = vsub.f32 1.0, %v84
      %v87 = vsub.f32 1.0, %v85
      %v88 = vmul.f32 %v86, %v74
      %v89 = vmul.f32 %v87, %v75
      %v91 = vsel %vm58, %v56, 0
      %v94 = vsel %vm58, %v57, 0
      %96 = vmatprep.subr.mxu0 0.0
      %97 = vmatpush1.msra.mxu0 %v78
      %98 = vmatprep.subr.mxu0 0.0
      %99 = vmatpush1.msra.mxu0 %v79
      %100 = vmatprep.subr.mxu0 0.0
      %101 = vmatpush1.msra.mxu0 0.0
      %102 = vmatprep.subr.mxu0 0.0
      %103 = vmatpush1.msra.mxu0 0.0
      %104 = vmatprep.subr.mxu0 0.0
      %105 = vmatpush1.msra.mxu0 0.0
      %106 = vmatprep.subr.mxu0 0.0
      %107 = vmatpush1.msra.mxu0 0.0
      %108 = vmatprep.subr.mxu0 0.0
      %109 = vmatpush1.msra.mxu0 0.0
      %110 = vmatprep.subr.mxu0 0.0
      %111 = vmatpush1.msra.mxu0 0.0
      %112 = vmatprep.subr.mxu0 0.0
      %113 = vmatpush1.msra.mxu0 0.0
      %114 = vmatprep.subr.mxu0 0.0
      %115 = vmatpush1.msra.mxu0 0.0
      %116 = vmatprep.subr.mxu0 0.0
      %117 = vmatpush1.msra.mxu0 0.0
      %118 = vmatprep.subr.mxu0 0.0
      %119 = vmatpush1.msra.mxu0 0.0
      %120 = vmatprep.subr.mxu0 0.0
      %121 = vmatpush1.msra.mxu0 0.0
      %122 = vmatprep.subr.mxu0 0.0
      %123 = vmatpush1.msra.mxu0 0.0
      %124 = vmatprep.subr.mxu0 0.0
      %125 = vmatpush1.msra.mxu0 0.0
      %126 = vmatprep.subr.mxu0 0.0
      %127 = vmatpush1.msra.mxu0 0.0
      %128 = vmatprep.subr.mxu0 0.0
      %129 = vmatpush1.msra.mxu0 0.0
      %130 = vmatprep.subr.mxu0 0.0
      %131 = vmatpush1.msra.mxu0 0.0
      %132 = vmatprep.subr.mxu0 0.0
      %133 = vmatpush1.msra.mxu0 0.0
      %134 = vmatprep.subr.mxu0 0.0
      %135 = vmatpush1.msra.mxu0 0.0
      %136 = vmatprep.subr.mxu0 0.0
      %137 = vmatpush1.msra.mxu0 0.0
      %138 = vmatprep.subr.mxu0 0.0
      %139 = vmatpush1.msra.mxu0 0.0
      %140 = vmatprep.subr.mxu0 0.0
      %141 = vmatpush1.msra.mxu0 0.0
      %142 = vmatprep.subr.mxu0 0.0
      %143 = vmatpush1.msra.mxu0 0.0
      %144 = vmatprep.subr.mxu0 0.0
      %145 = vmatpush1.msra.mxu0 0.0
      %146 = vmatprep.subr.mxu0 0.0
      %147 = vmatpush1.msra.mxu0 0.0
      %148 = vmatprep.subr.mxu0 0.0
      %149 = vmatpush1.msra.mxu0 0.0
      %150 = vmatprep.subr.mxu0 0.0
      %151 = vmatpush1.msra.mxu0 0.0
      %152 = vmatprep.subr.mxu0 0.0
      %153 = vmatpush1.msra.mxu0 0.0
      %154 = vmatprep.subr.mxu0 0.0
      %155 = vmatpush1.msra.mxu0 0.0
      %156 = vmatprep.subr.mxu0 0.0
      %157 = vmatpush1.msra.mxu0 0.0
      %158 = vmatprep.subr.mxu0 0.0
      %159 = vmatpush1.msra.mxu0 0.0
      %160 = vmatprep.mubr.f32.mxu0 0.0
      %161 = vmatmul.mubr.f32.gmra.mrb[0].mxu0 %v91
      %v162 = vpop.f32.mrb[0].mxu0
      %v163 = vadd.f32 %v88, %v162
      %v164 = vpop.f32.mrb[0].mxu0
      %165 = vmatprep.mubr.f32.mxu0 0.0
      %166 = vmatmul.mubr.f32.gmra.mrb[0].mxu0 %v94
      %v167 = vpop.f32.mrb[0].mxu0
      %v168 = vadd.f32 %v89, %v167
      %v169 = vpop.f32.mrb[0].mxu0
      %170 = vdwg.mxu0
      %v171 = vmul.f32 %v86, %v76
      %v172 = vmul.f32 %v87, %v77
      %v173 = vld [vmem:[#allocation2] sm:$0xff]
      %v174 = vld [vmem:[#allocation2 + $0x8] sm:$0xff]
      %v175 = vmul.f32 %v163, %v163
      %v176 = vmul.f32 %v168, %v168
      %v177 = vmul.f32 %v171, %v171
      %v178 = vmul.f32 %v172, %v172
      %v179 = vadd.f32 %v175, %v177
      %v180 = vadd.f32 %v176, %v178
      %v181 = vadd.f32 %v173, %v179
      %v182 = vadd.f32 %v174, %v180
      %183 = vst.msk [vmem:[#allocation2] sm:$0xff] %vm58, %v181
      %184 = vst.msk [vmem:[#allocation2 + $0x8] sm:$0xff] %vm58, %v182
    $region30: #{tpu_custom_call.1} parent=1 // loop_footer
      %s66 = sadd.s32 1, %s62
    $region31: #{tpu_custom_call.1} parent=1 // loop_footer_branch
      %61 = sbr.rel target = $region27
    $region32: #{tpu_custom_call.1} parent=1 // loop_exit
      _
    %v185 = vld [vmem:[#allocation2] sm:$0xff]
    %v186 = vld [vmem:[#allocation2 + $0x8] sm:$0xff]
    %v187 = vsel %vm58, %v185, 0.0
    %v188 = vsel %vm58, %v186, 0.0
    %v189 = vadd.f32 %v187, %v188
    %190 = vadd.xlane.f32.xlu0 %v189
    %v191 = vpop.xlane.xlu0 %190
    %v192 = vrot.slane %v191, 4
    %v193 = vadd.f32 %v191, %v192
    %v194 = vrot.slane %v193, 2
    %v195 = vadd.f32 %v193, %v194
    %v196 = vrot.slane %v195, 1
    %v197 = vadd.f32 %v195, %v196
    %s198 = vtos %v197
    %s199 = scalar_lea.smem [#allocation9], 0
    %200 = sst [smem:[%s199]] %s198
    // Predicated region
    $region33: #{tpu_custom_call.1} parent=1 // pred_check
      _
    $region34: #{tpu_custom_call.1} parent=1 // pred_check_branch
      %202 = sbr.rel (0) target = $region36
    $region35: #{tpu_custom_call.1} parent=1 // pred_region
      %s204 = ssub.s32 16, 16
      %205 = vsyncadd [#allocation5], %s204
      %208 = dma.smem_to_hbm [#allocation9], 16, %s3, [#allocation5]
    $region36: #{tpu_custom_call.1} parent=1 // pred_fallthru
      _
    // Predicated region
    $region37: #{tpu_custom_call.1} parent=1 // pred_check
      _
    $region38: #{tpu_custom_call.1} parent=1 // pred_check_branch
      %210 = sbr.rel (0) target = $region40
    $region39: #{tpu_custom_call.1} parent=1 // pred_region
      %211 = dma.done [#allocation5], 16
    $region40: #{tpu_custom_call.1} parent=1 // pred_fallthru
      _
    %212 = sfence
    %213 = vsyncpa [#allocation4], 1
    %214 = vsyncpa [#allocation7], 1
    %215 = vsyncpa [#allocation5], 1

</llo_original>
